<compile_context>
chip_gen: v6e
topology: v6e:2x2x1
jax: 0.10.0
libtpu: 0.0.40
codegen_flags: <defaults>
</compile_context>

<pallas_src>
import functools
import math

import numpy as np
import jax
import jax.numpy as jnp
from jax.experimental import pallas as pl
from jax.experimental.pallas import tpu as pltpu

_LANE = 128
_GRAN = 2048   # node-tile granularity: tile//128 is a multiple of 16, a valid
               # sublane tiling for both f32 and bf16 blocks.


def _round_up(x, m):
    return ((x + m - 1) // m) * m


# -----------------------------------------------------------------------------
# Kernel 1: Bayesian flows.
#   discrete_var_bayesian_flow :  theta = softmax(beta1*t^2*(K*x-1) + sqrt(beta1*t^2*K)*eps_h)
#   continuous_var_bayesian_flow: gamma = 1 - sigma1^(2t);
#                                 mu = gamma*pos + sqrt(gamma*(1-gamma))*eps_pos
# Layout: each feature row is a [S, 128] node slab (S = TILE_N//128).
#   a_ref : [1+D , S, 128] f32      rows = (t, pos)
#   b_ref : [2K+D, S, 128] f32/bf16 rows = (one_hot_x, eps_h, eps_pos)
#   out   : [K+D+1,S, 128] f32      rows = (theta, mu, gamma)
# -----------------------------------------------------------------------------
def _bfn_flow_kernel(a_ref, b_ref, out_ref, *, log_s1, beta1, K, D):
    a = a_ref[...]
    b = b_ref[...].astype(jnp.float32)
    t = a[0]                          # [S, 128]
    pos = a[1:1 + D]                  # [D, S, 128]
    x = b[0:K]                        # [K, S, 128]
    eps_h = b[K:2 * K]                # [K, S, 128]
    eps_pos = b[2 * K:2 * K + D]      # [D, S, 128]

    # ---- discrete_var_bayesian_flow ----
    beta = beta1 * t * t
    mean = beta * (float(K) * x - 1.0)
    std = jnp.sqrt(beta * float(K))
    y = mean + std * eps_h            # [K, S, 128]
    m = y[0]
    for k in range(1, K):             # unrolled VALU max over the class rows
        m = jnp.maximum(m, y[k])
    ey = jnp.exp(y - m)
    den = ey[0]
    for k in range(1, K):             # unrolled VALU sum over the class rows
        den = den + ey[k]
    theta = ey / den                  # exact divide: rows sum to exactly 1

    # ---- continuous_var_bayesian_flow ----
    gamma = 1.0 - jnp.exp(2.0 * t * log_s1)          # 1 - sigma1**(2t)
    mu = gamma * pos + eps_pos * jnp.sqrt(gamma * (1.0 - gamma))

    out_ref[0:K] = theta
    out_ref[K:K + D] = mu
    out_ref[K + D] = gamma


# -----------------------------------------------------------------------------
# Kernel 2: continuous-time losses.
#   ctime4continuous_loss: per-node  -log(sigma1) * sum_d (x_pred-x)^2 * sigma1^(-2t)
#   ctime4discrete_loss  : per-tile partial sums of K*beta1*t*sum_k (e_x - e_hat)^2
#   a_ref  : [1+2D, S, 128] f32      rows = (t, x_pred, pos)
#   b_ref  : [2K  , S, 128] f32/bf16 rows = (one_hot_x, p0)
#   closs  : [1   , S, 128] f32      per-node continuous loss
#   dpart  : [1, 1, 128]    f32      lane-partial sums of the discrete loss
# -----------------------------------------------------------------------------
def _ctime_loss_kernel(a_ref, b_ref, closs_ref, dpart_ref, *, log_s1, beta1, K, D):
    a = a_ref[...]
    b = b_ref[...].astype(jnp.float32)
    t = a[0]
    x_pred = a[1:1 + D]
    pos = a[1 + D:1 + 2 * D]
    onehot = b[0:K]
    p0 = b[K:2 * K]

    d = x_pred - pos
    d2 = d * d
    sq = d2[0]
    for i in range(1, D):
        sq = sq + d2[i]
    closs_ref[0] = (-log_s1) * sq * jnp.exp(-2.0 * t * log_s1)

    e = onehot - p0
    e2 = e * e
    s = e2[0]
    for k in range(1, K):
        s = s + e2[k]
    dterm = (float(K) * beta1) * t * s      # [S, 128]; exactly 0 on padded nodes
    dpart_ref[0] = jnp.sum(dterm, axis=0, keepdims=True)


# -----------------------------------------------------------------------------
# layout plumbing (one fused copy per call; packed API skips it entirely)
# -----------------------------------------------------------------------------
def _pack_nodes(arrs, n_pad, dtype):
    """[N, f_i] arrays -> one [sum f_i, n_pad//128, 128] node-dense slab."""
    stacked = jnp.concatenate([jnp.asarray(a, jnp.float32) for a in arrs], axis=1)
    n, f = stacked.shape
    st = jnp.transpose(stacked)                        # [f, N]
    if n_pad > n:
        st = jnp.pad(st, ((0, 0), (0, n_pad - n)))     # zero-pad node axis
    return st.astype(dtype).reshape(f, n_pad // _LANE, _LANE)


def _unpack_nodes(slab, n, widths):
    """[F, n_pad//128, 128] slab -> list of [N, w] arrays (row splits)."""
    f = slab.shape[0]
    full = jnp.transpose(slab.reshape(f, -1)[:, :n])   # [N, F]
    outs, o = [], 0
    for w in widths:
        outs.append(full[:, o:o + w])
        o += w
    return outs


class BFNBasePallas:
    """JAX / Pallas port of the computational core of `bfnBase`.

    Public API keeps the PyTorch [N, feat] convention; internally everything
    is packed once into a node-dense [feat, n_pad//128, 128] slab.  Callers
    that keep their data in that layout can use the `*_packed` methods and
    avoid the packing copy entirely.
    """

    def __init__(self, sigma1_coord=0.02, beta1=3.0, K=5, bins=9,
                 tile_n=32768, in_dtype=jnp.float32):
        self.sigma1_coord = float(sigma1_coord)
        self._log_s1 = math.log(self.sigma1_coord)
        self.beta1 = float(beta1)
        self.K = int(K)
        self.bins = float(bins)
        self.tile_n = int(tile_n)          # node tile (multiple of _GRAN used)
        self.in_dtype = in_dtype           # HBM dtype for noise-like inputs
        k_c, self.k_l, self.k_r = self.get_k_params(bins)
        self.K_c = jnp.asarray(k_c, dtype=jnp.float32)

    # ----- pure-python helper, identical to the torch version -----
    def get_k_params(self, bins):
        list_c, list_l, list_r = [], [], []
        for k in range(1, int(bins + 1)):
            k_c = (2 * k - 1) / bins - 1
            list_c.append(k_c)
            list_l.append(k_c - 1 / bins)
            list_r.append(k_c + 1 / bins)
        return (list_c, list_l, list_r)

    # ----- tiling -----
    def _tile_and_pad(self, n):
        n128 = _round_up(max(int(n), 1), _LANE)
        tile_cap = max(_GRAN, (self.tile_n // _GRAN) * _GRAN)
        if n128 <= _GRAN:
            return n128, n128                                  # single small tile
        if n128 <= tile_cap:
            # fits one tile; split into 2 so both v7x TensorCores get work
            tile = _round_up(-(-n128 // 2), _GRAN)
            return tile, _round_up(n128, tile)
        return tile_cap, _round_up(n128, tile_cap)

    # ----- fused Bayesian flows -----
    def bayesian_flows_packed(self, slab_a, slab_b, *, D, tile):
        K = self.K
        n_pad = slab_a.shape[1] * _LANE
        assert tile % _LANE == 0 and n_pad % tile == 0
        S = tile // _LANE
        grid = (n_pad // tile,)
        kernel = functools.partial(_bfn_flow_kernel, log_s1=self._log_s1,
                                   beta1=self.beta1, K=K, D=D)

        def bspec(f):
            return pl.BlockSpec((f, S, _LANE), lambda i: (0, i, 0))

        return pl.pallas_call(
            kernel,
            grid=grid,
            in_specs=[bspec(1 + D), bspec(2 * K + D)],
            out_specs=bspec(K + D + 1),
            out_shape=jax.ShapeDtypeStruct((K + D + 1, n_pad // _LANE, _LANE),
                                           jnp.float32),
            compiler_params=pltpu.CompilerParams(
                dimension_semantics=("parallel",)),
        )(slab_a, slab_b)

    def bayesian_flows(self, t, x, pos, eps_h, eps_pos):
        N, K = x.shape
        D = pos.shape[1]
        tile, n_pad = self._tile_and_pad(N)
        t = jnp.reshape(t, (N, 1))
        slab_a = _pack_nodes([t, pos], n_pad, jnp.float32)
        slab_b = _pack_nodes([x, eps_h, eps_pos], n_pad, self.in_dtype)
        out = self.bayesian_flows_packed(slab_a, slab_b, D=D, tile=tile)
        theta, mu, gamma = _unpack_nodes(out, N, [K, D, 1])
        return theta, mu, gamma

    # ----- fused continuous-time losses -----
    def ctime_losses_packed(self, slab_a, slab_b, *, D, tile):
        K = self.K
        n_pad = slab_a.shape[1] * _LANE
        assert tile % _LANE == 0 and n_pad % tile == 0
        S = tile // _LANE
        nt = n_pad // tile
        kernel = functools.partial(_ctime_loss_kernel, log_s1=self._log_s1,
                                   beta1=self.beta1, K=K, D=D)

        def node_spec(f):
            return pl.BlockSpec((f, S, _LANE), lambda i: (0, i, 0))

        return pl.pallas_call(
            kernel,
            grid=(nt,),
            in_specs=[node_spec(1 + 2 * D), node_spec(2 * K)],
            out_specs=(node_spec(1),
                       pl.BlockSpec((1, 1, _LANE), lambda i: (i, 0, 0))),
            out_shape=(jax.ShapeDtypeStruct((1, n_pad // _LANE, _LANE), jnp.float32),
                       jax.ShapeDtypeStruct((nt, 1, _LANE), jnp.float32)),
            compiler_params=pltpu.CompilerParams(
                dimension_semantics=("parallel",)),
        )(slab_a, slab_b)

    def ctime_losses(self, t, x_pred, pos, one_hot_x, p0):
        N, K = one_hot_x.shape
        D = pos.shape[1]
        tile, n_pad = self._tile_and_pad(N)
        t = jnp.reshape(t, (N, 1))
        slab_a = _pack_nodes([t, x_pred, pos], n_pad, jnp.float32)
        slab_b = _pack_nodes([one_hot_x, p0], n_pad, self.in_dtype)
        closs_slab, dpart = self.ctime_losses_packed(slab_a, slab_b, D=D, tile=tile)
        # ctime4continuous_loss returns a per-sample vector [N];
        # ctime4discrete_loss returns the scalar mean (padded nodes contribute 0).
        closs = closs_slab.reshape(-1)[:N]
        dloss = jnp.sum(dpart) / N
        return closs, dloss

    # TODO(synk): zero_center_of_mass (scatter_mean over segments),
    # discretised_cdf, i0e/i1e circular losses and the MixtureSameFamily
    # discrete-time losses use segment scatter / Bessel / distribution
    # machinery with no clean single-kernel Pallas mapping; the
    # interdependency_modeling EGNN backbone is not part of bfnBase itself.


# -----------------------------------------------------------------------------
# pure-JAX reference (mirrors the torch math) for a correctness sanity check
# -----------------------------------------------------------------------------
def _maybe_round(a, dtype):
    if dtype == jnp.float32:
        return a
    return a.astype(dtype).astype(jnp.float32)


def _reference_flows(model, t, x, pos, eps_h, eps_pos):
    x = _maybe_round(x, model.in_dtype)
    eps_h = _maybe_round(eps_h, model.in_dtype)
    eps_pos = _maybe_round(eps_pos, model.in_dtype)
    beta = model.beta1 * t ** 2
    mean = beta * (model.K * x - 1.0)
    std = jnp.sqrt(beta * model.K)
    theta = jax.nn.softmax(mean + std * eps_h, axis=-1)
    gamma = 1.0 - jnp.power(model.sigma1_coord, 2.0 * t)
    mu = gamma * pos + eps_pos * jnp.sqrt(gamma * (1.0 - gamma))
    return theta, mu, gamma


def _reference_losses(model, t, x_pred, pos, one_hot_x, p0):
    one_hot_x = _maybe_round(one_hot_x, model.in_dtype)
    p0 = _maybe_round(p0, model.in_dtype)
    closs = (-np.log(model.sigma1_coord)) * jnp.sum((x_pred - pos) ** 2, -1) \
        * jnp.power(model.sigma1_coord, -2.0 * t[:, 0])
    dloss = jnp.mean(model.K * model.beta1 * t[:, 0]
                     * jnp.sum((one_hot_x - p0) ** 2, -1))
    return closs, dloss


def _run_case(model, N, K, D, seed, rtol=1e-4):
    key = jax.random.PRNGKey(seed)
    k_t, k_cls, k_pos, k_eh, k_ep = jax.random.split(key, 5)

    t = jax.random.uniform(k_t, (N, 1), jnp.float32, 0.05, 0.95)
    classes = jax.random.randint(k_cls, (N,), 0, K)
    x = jax.nn.one_hot(classes, K, dtype=jnp.float32)           # [N, K]
    pos = jax.random.uniform(k_pos, (N, D), dtype=jnp.float32)  # frac coords
    eps_h = jax.random.normal(k_eh, (N, K), dtype=jnp.float32)
    eps_pos = jax.random.normal(k_ep, (N, D), dtype=jnp.float32)

    flows = jax.jit(model.bayesian_flows)
    losses = jax.jit(model.ctime_losses)

    # Bayesian flows (kernel 1)
    theta, mu_coord, gamma = flows(t, x, pos, eps_h, eps_pos)
    # Loss terms (kernel 2); use mu_coord as the stand-in coordinate
    # prediction and theta as p0 (the EGNN head is outside bfnBase).
    closs, dloss = losses(t, mu_coord, pos, x, theta)
    jax.block_until_ready((theta, mu_coord, gamma, closs, dloss))

    r_theta, r_mu, r_gamma = _reference_flows(model, t, x, pos, eps_h, eps_pos)
    r_closs, r_dloss = _reference_losses(model, t, mu_coord, pos, x, theta)

    np.testing.assert_allclose(np.asarray(theta), np.asarray(r_theta),
                               rtol=rtol, atol=1e-5)
    np.testing.assert_allclose(np.asarray(mu_coord), np.asarray(r_mu),
                               rtol=rtol, atol=1e-5)
    np.testing.assert_allclose(np.asarray(gamma), np.asarray(r_gamma),
                               rtol=rtol, atol=1e-6)
    np.testing.assert_allclose(np.asarray(closs), np.asarray(r_closs),
                               rtol=rtol, atol=1e-4)
    np.testing.assert_allclose(np.asarray(dloss), np.asarray(r_dloss),
                               rtol=rtol, atol=1e-4)


if __name__ == "__main__":
    K, D = 5, 3  # atom classes, spatial dims

    # small single-tile case (N padded to 128 lanes, block == full array)
    _run_case(BFNBasePallas(sigma1_coord=0.02, beta1=3.0, K=K, bins=9),
              N=8, K=K, D=D, seed=0)

    # moderate N: automatically split into 2 tiles so both v7x TCs get work
    _run_case(BFNBasePallas(sigma1_coord=0.02, beta1=3.0, K=K, bins=9),
              N=2500, K=K, D=D, seed=1)

    # multi-tile grid (tile=2048 -> grid=3) with padding, f32 inputs
    _run_case(BFNBasePallas(sigma1_coord=0.02, beta1=3.0, K=K, bins=9,
                            tile_n=2048),
              N=5000, K=K, D=D, seed=2)

    # same, but noise-like inputs stored as bf16 in HBM (~20-25% less traffic)
    _run_case(BFNBasePallas(sigma1_coord=0.02, beta1=3.0, K=K, bins=9,
                            tile_n=2048, in_dtype=jnp.bfloat16),
              N=5000, K=K, D=D, seed=3)

    print("KERNEL_OK")
</pallas_src>

<mosaic_0001>
module attributes {stable_mosaic.version = 11 : i64} {
  func.func @_bfn_flow_kernel(%arg0: i32, %arg1: memref<4x1x128xf32, #tpu.memory_space<vmem>>, %arg2: memref<13x1x128xf32, #tpu.memory_space<vmem>>, %arg3: memref<9x1x128xf32, #tpu.memory_space<vmem>>) attributes {dimension_semantics = [#tpu.dimension_semantics<parallel>], iteration_bounds = array<i64: 1>, scalar_prefetch = 0 : i64, scratch_operands = 0 : i64, tpu.core_type = #tpu.core_type<tc>, window_params = [{transform_indices = @transform_0, window_bounds = array<i64: 4, 1, 128>}, {transform_indices = @transform_1, window_bounds = array<i64: 13, 1, 128>}, {transform_indices = @transform_2, window_bounds = array<i64: 9, 1, 128>}]} {
    %c0 = arith.constant 0 : index
    %c0_0 = arith.constant 0 : index
    %c0_1 = arith.constant 0 : index
    %0 = vector.load %arg1[%c0, %c0_0, %c0_1] : memref<4x1x128xf32, #tpu.memory_space<vmem>>, vector<4x1x128xf32>
    %c0_2 = arith.constant 0 : index
    %c0_3 = arith.constant 0 : index
    %c0_4 = arith.constant 0 : index
    %1 = vector.load %arg2[%c0_2, %c0_3, %c0_4] : memref<13x1x128xf32, #tpu.memory_space<vmem>>, vector<13x1x128xf32>
    %2 = vector.extract_strided_slice %0 {offsets = [0, 0, 0], sizes = [1, 1, 128], strides = [1, 1, 1]} : vector<4x1x128xf32> to vector<1x1x128xf32>
    %3 = vector.shape_cast %2 : vector<1x1x128xf32> to vector<1x128xf32>
    %4 = vector.extract_strided_slice %0 {offsets = [1, 0, 0], sizes = [3, 1, 128], strides = [1, 1, 1]} : vector<4x1x128xf32> to vector<3x1x128xf32>
    %5 = vector.extract_strided_slice %1 {offsets = [0, 0, 0], sizes = [5, 1, 128], strides = [1, 1, 1]} : vector<13x1x128xf32> to vector<5x1x128xf32>
    %6 = vector.extract_strided_slice %1 {offsets = [5, 0, 0], sizes = [5, 1, 128], strides = [1, 1, 1]} : vector<13x1x128xf32> to vector<5x1x128xf32>
    %7 = vector.extract_strided_slice %1 {offsets = [10, 0, 0], sizes = [3, 1, 128], strides = [1, 1, 1]} : vector<13x1x128xf32> to vector<3x1x128xf32>
    %cst = arith.constant 3.000000e+00 : f32
    %8 = vector.broadcast %cst : f32 to vector<1x128xf32>
    %9 = arith.mulf %8, %3 : vector<1x128xf32>
    %10 = arith.mulf %9, %3 : vector<1x128xf32>
    %cst_5 = arith.constant 5.000000e+00 : f32
    %11 = vector.broadcast %cst_5 : f32 to vector<5x1x128xf32>
    %12 = arith.mulf %11, %5 : vector<5x1x128xf32>
    %cst_6 = arith.constant 1.000000e+00 : f32
    %13 = vector.broadcast %cst_6 : f32 to vector<5x1x128xf32>
    %14 = arith.subf %12, %13 : vector<5x1x128xf32>
    %15 = vector.shape_cast %10 : vector<1x128xf32> to vector<1x1x128xf32>
    %16 = vector.broadcast %15 : vector<1x1x128xf32> to vector<5x1x128xf32>
    %17 = arith.mulf %16, %14 : vector<5x1x128xf32>
    %cst_7 = arith.constant 5.000000e+00 : f32
    %18 = vector.broadcast %cst_7 : f32 to vector<1x128xf32>
    %19 = arith.mulf %10, %18 : vector<1x128xf32>
    %20 = math.sqrt %19 : vector<1x128xf32>
    %21 = vector.shape_cast %20 : vector<1x128xf32> to vector<1x1x128xf32>
    %22 = vector.broadcast %21 : vector<1x1x128xf32> to vector<5x1x128xf32>
    %23 = arith.mulf %22, %6 : vector<5x1x128xf32>
    %24 = arith.addf %17, %23 : vector<5x1x128xf32>
    %25 = vector.extract_strided_slice %24 {offsets = [0, 0, 0], sizes = [1, 1, 128], strides = [1, 1, 1]} : vector<5x1x128xf32> to vector<1x1x128xf32>
    %26 = vector.shape_cast %25 : vector<1x1x128xf32> to vector<1x128xf32>
    %27 = vector.extract_strided_slice %24 {offsets = [1, 0, 0], sizes = [1, 1, 128], strides = [1, 1, 1]} : vector<5x1x128xf32> to vector<1x1x128xf32>
    %28 = vector.shape_cast %27 : vector<1x1x128xf32> to vector<1x128xf32>
    %29 = arith.maximumf %26, %28 : vector<1x128xf32>
    %30 = vector.extract_strided_slice %24 {offsets = [2, 0, 0], sizes = [1, 1, 128], strides = [1, 1, 1]} : vector<5x1x128xf32> to vector<1x1x128xf32>
    %31 = vector.shape_cast %30 : vector<1x1x128xf32> to vector<1x128xf32>
    %32 = arith.maximumf %29, %31 : vector<1x128xf32>
    %33 = vector.extract_strided_slice %24 {offsets = [3, 0, 0], sizes = [1, 1, 128], strides = [1, 1, 1]} : vector<5x1x128xf32> to vector<1x1x128xf32>
    %34 = vector.shape_cast %33 : vector<1x1x128xf32> to vector<1x128xf32>
    %35 = arith.maximumf %32, %34 : vector<1x128xf32>
    %36 = vector.extract_strided_slice %24 {offsets = [4, 0, 0], sizes = [1, 1, 128], strides = [1, 1, 1]} : vector<5x1x128xf32> to vector<1x1x128xf32>
    %37 = vector.shape_cast %36 : vector<1x1x128xf32> to vector<1x128xf32>
    %38 = arith.maximumf %35, %37 : vector<1x128xf32>
    %39 = vector.shape_cast %38 : vector<1x128xf32> to vector<1x1x128xf32>
    %40 = vector.broadcast %39 : vector<1x1x128xf32> to vector<5x1x128xf32>
    %41 = arith.subf %24, %40 : vector<5x1x128xf32>
    %42 = math.exp %41 : vector<5x1x128xf32>
    %43 = vector.extract_strided_slice %42 {offsets = [0, 0, 0], sizes = [1, 1, 128], strides = [1, 1, 1]} : vector<5x1x128xf32> to vector<1x1x128xf32>
    %44 = vector.shape_cast %43 : vector<1x1x128xf32> to vector<1x128xf32>
    %45 = vector.extract_strided_slice %42 {offsets = [1, 0, 0], sizes = [1, 1, 128], strides = [1, 1, 1]} : vector<5x1x128xf32> to vector<1x1x128xf32>
    %46 = vector.shape_cast %45 : vector<1x1x128xf32> to vector<1x128xf32>
    %47 = arith.addf %44, %46 : vector<1x128xf32>
    %48 = vector.extract_strided_slice %42 {offsets = [2, 0, 0], sizes = [1, 1, 128], strides = [1, 1, 1]} : vector<5x1x128xf32> to vector<1x1x128xf32>
    %49 = vector.shape_cast %48 : vector<1x1x128xf32> to vector<1x128xf32>
    %50 = arith.addf %47, %49 : vector<1x128xf32>
    %51 = vector.extract_strided_slice %42 {offsets = [3, 0, 0], sizes = [1, 1, 128], strides = [1, 1, 1]} : vector<5x1x128xf32> to vector<1x1x128xf32>
    %52 = vector.shape_cast %51 : vector<1x1x128xf32> to vector<1x128xf32>
    %53 = arith.addf %50, %52 : vector<1x128xf32>
    %54 = vector.extract_strided_slice %42 {offsets = [4, 0, 0], sizes = [1, 1, 128], strides = [1, 1, 1]} : vector<5x1x128xf32> to vector<1x1x128xf32>
    %55 = vector.shape_cast %54 : vector<1x1x128xf32> to vector<1x128xf32>
    %56 = arith.addf %53, %55 : vector<1x128xf32>
    %57 = vector.shape_cast %56 : vector<1x128xf32> to vector<1x1x128xf32>
    %58 = vector.broadcast %57 : vector<1x1x128xf32> to vector<5x1x128xf32>
    %59 = arith.divf %42, %58 : vector<5x1x128xf32>
    %cst_8 = arith.constant 2.000000e+00 : f32
    %60 = vector.broadcast %cst_8 : f32 to vector<1x128xf32>
    %61 = arith.mulf %60, %3 : vector<1x128xf32>
    %cst_9 = arith.constant -3.91202307 : f32
    %62 = vector.broadcast %cst_9 : f32 to vector<1x128xf32>
    %63 = arith.mulf %61, %62 : vector<1x128xf32>
    %64 = math.exp %63 : vector<1x128xf32>
    %cst_10 = arith.constant 1.000000e+00 : f32
    %65 = vector.broadcast %cst_10 : f32 to vector<1x128xf32>
    %66 = arith.subf %65, %64 : vector<1x128xf32>
    %67 = vector.shape_cast %66 : vector<1x128xf32> to vector<1x1x128xf32>
    %68 = vector.broadcast %67 : vector<1x1x128xf32> to vector<3x1x128xf32>
    %69 = arith.mulf %68, %4 : vector<3x1x128xf32>
    %cst_11 = arith.constant 1.000000e+00 : f32
    %70 = vector.broadcast %cst_11 : f32 to vector<1x128xf32>
    %71 = arith.subf %70, %66 : vector<1x128xf32>
    %72 = arith.mulf %66, %71 : vector<1x128xf32>
    %73 = math.sqrt %72 : vector<1x128xf32>
    %74 = vector.shape_cast %73 : vector<1x128xf32> to vector<1x1x128xf32>
    %75 = vector.broadcast %74 : vector<1x1x128xf32> to vector<3x1x128xf32>
    %76 = arith.mulf %7, %75 : vector<3x1x128xf32>
    %77 = arith.addf %69, %76 : vector<3x1x128xf32>
    %c0_12 = arith.constant 0 : index
    %c0_13 = arith.constant 0 : index
    %c0_14 = arith.constant 0 : index
    %78 = vector.load %arg3[%c0_12, %c0_13, %c0_14] : memref<9x1x128xf32, #tpu.memory_space<vmem>>, vector<5x1x128xf32>
    tpu.vector_store %arg3[%c0_12, %c0_13, %c0_14], %59 {strides = array<i32>} : memref<9x1x128xf32, #tpu.memory_space<vmem>>, vector<5x1x128xf32>,
    %c5 = arith.constant 5 : index
    %c0_15 = arith.constant 0 : index
    %c0_16 = arith.constant 0 : index
    %79 = vector.load %arg3[%c5, %c0_15, %c0_16] : memref<9x1x128xf32, #tpu.memory_space<vmem>>, vector<3x1x128xf32>
    tpu.vector_store %arg3[%c5, %c0_15, %c0_16], %77 {strides = array<i32>} : memref<9x1x128xf32, #tpu.memory_space<vmem>>, vector<3x1x128xf32>,
    %c8 = arith.constant 8 : index
    %c0_17 = arith.constant 0 : index
    %c0_18 = arith.constant 0 : index
    %80 = vector.load %arg3[%c8, %c0_17, %c0_18] : memref<9x1x128xf32, #tpu.memory_space<vmem>>, vector<1x1x128xf32>
    %81 = vector.shape_cast %80 : vector<1x1x128xf32> to vector<1x128xf32>
    %82 = vector.shape_cast %66 : vector<1x128xf32> to vector<1x1x128xf32>
    tpu.vector_store %arg3[%c8, %c0_17, %c0_18], %82 {strides = array<i32>} : memref<9x1x128xf32, #tpu.memory_space<vmem>>, vector<1x1x128xf32>,
    return
  }
  func.func @transform_0(%arg0: i32) -> (i32, i32, i32) {
    %c0_i32 = arith.constant 0 : i32
    %c0_i32_0 = arith.constant 0 : i32
    %c0_i32_1 = arith.constant 0 : i32
    return %c0_i32, %arg0, %c0_i32_0 : i32, i32, i32
  }
  func.func @transform_1(%arg0: i32) -> (i32, i32, i32) {
    %c0_i32 = arith.constant 0 : i32
    %c0_i32_0 = arith.constant 0 : i32
    %c0_i32_1 = arith.constant 0 : i32
    return %c0_i32, %arg0, %c0_i32_0 : i32, i32, i32
  }
  func.func @transform_2(%arg0: i32) -> (i32, i32, i32) {
    %c0_i32 = arith.constant 0 : i32
    %c0_i32_0 = arith.constant 0 : i32
    %c0_i32_1 = arith.constant 0 : i32
    return %c0_i32, %arg0, %c0_i32_0 : i32, i32, i32
  }
}

</mosaic_0001>

<llo_original>
// kernel: bayesian_flows.1
$region0: #{bayesian_flows.1}
  #allocation0 [shape = 'u32[]', space=smem, size = 0x4, offset = 0x4, fixed_abs, tag = 'smem constant byte address 0x4 - core index']
  #allocation1 [shape = 'u32[144,128]{1,0:T(1,128)}', space=vmem, size = 0x12000, scoped, tag = 'internal scratch']
  %s0 = inlined_call_operand.vmem [shape: f32[4,1,128], index: 0, kind: input, shape index: {}]
  %s1 = inlined_call_operand.vmem [shape: f32[13,1,128], index: 1, kind: input, shape index: {}]
  %s2 = inlined_call_operand.vmem [shape: f32[9,1,128], index: 2, kind: output, shape index: {}]
  %s3 = sld [smem:[#allocation0]]
  $region18: #{bayesian_flows.1} parent=0
    _
  %s5 = ssub.s32 1, %s3
  %s6 = scalar_select 0, %s5, %s3
  // Predicated region
  $region2: #{bayesian_flows.1} parent=0 // pred_check
    _
  $region3: #{bayesian_flows.1} parent=0 // pred_check_branch
    %8 = sbr.rel (0) target = $region5
  $region4: #{bayesian_flows.1} parent=0 // pred_region
    _
  $region5: #{bayesian_flows.1} parent=0 // pred_fallthru
    _
  // Predicated region
  $region6: #{bayesian_flows.1} parent=0 // pred_check
    _
  $region7: #{bayesian_flows.1} parent=0 // pred_check_branch
    %10 = sbr.rel (0) target = $region9
  $region8: #{bayesian_flows.1} parent=0 // pred_region
    _
  $region9: #{bayesian_flows.1} parent=0 // pred_fallthru
    _
  %v11 = vld [vmem:[%s0] sm:$0x1]
  %v12 = vld [vmem:[%s0 + $0x1] sm:$0x1]
  %v13 = vld [vmem:[%s0 + $0x2] sm:$0x1]
  %v14 = vld [vmem:[%s0 + $0x3] sm:$0x1]
  %v15 = vld [vmem:[%s1] sm:$0x1]
  %v16 = vld [vmem:[%s1 + $0x1] sm:$0x1]
  %v17 = vld [vmem:[%s1 + $0x2] sm:$0x1]
  %v18 = vld [vmem:[%s1 + $0x3] sm:$0x1]
  %v19 = vld [vmem:[%s1 + $0x4] sm:$0x1]
  %v20 = vld [vmem:[%s1 + $0x5] sm:$0x1]
  %v21 = vld [vmem:[%s1 + $0x6] sm:$0x1]
  %v22 = vld [vmem:[%s1 + $0x7] sm:$0x1]
  %v23 = vld [vmem:[%s1 + $0x8] sm:$0x1]
  %v24 = vld [vmem:[%s1 + $0x9] sm:$0x1]
  %v25 = vld [vmem:[%s1 + $0xa] sm:$0x1]
  %v26 = vld [vmem:[%s1 + $0xb] sm:$0x1]
  %v27 = vld [vmem:[%s1 + $0xc] sm:$0x1]
  %v28 = vmul.f32 %v11, 3.0
  %v29 = vmul.f32 %v28, %v11
  %v30 = vmul.f32 %v15, 5.0
  %v31 = vmul.f32 %v16, 5.0
  %v32 = vmul.f32 %v17, 5.0
  %v33 = vmul.f32 %v18, 5.0
  %v34 = vmul.f32 %v19, 5.0
  %v35 = vsub.f32 %v30, 1.0
  %v36 = vsub.f32 %v31, 1.0
  %v37 = vsub.f32 %v32, 1.0
  %v38 = vsub.f32 %v33, 1.0
  %v39 = vsub.f32 %v34, 1.0
  %v40 = vmul.f32 %v29, %v35
  %v41 = vmul.f32 %v29, %v36
  %v42 = vmul.f32 %v29, %v37
  %v43 = vmul.f32 %v29, %v38
  %v44 = vmul.f32 %v29, %v39
  %v45 = vmul.f32 %v29, 5.0
  %v46 = vrsqrt.pop %v45
  %v47 = vmul.f32 %v45, %v46
  %vm48 = vcmp.eq.f32.partialorder %v45, inf
  %v49 = vsel %vm48, %v45, %v47
  %vm50 = vcmp.eq.f32.partialorder %v45, 0.0
  %v51 = vand.u32 %v45, 2147483648
  %v52 = vsel %vm50, %v51, %v49
  %v53 = vmul.f32 %v52, %v20
  %v54 = vmul.f32 %v52, %v21
  %v55 = vmul.f32 %v52, %v22
  %v56 = vmul.f32 %v52, %v23
  %v57 = vmul.f32 %v52, %v24
  %v58 = vadd.f32 %v40, %v53
  %v59 = vadd.f32 %v41, %v54
  %v60 = vadd.f32 %v42, %v55
  %v61 = vadd.f32 %v43, %v56
  %v62 = vadd.f32 %v44, %v57
  %v63 = vmax.f32 %v58, %v59
  %v64 = vmax.f32 %v63, %v60
  %v65 = vmax.f32 %v64, %v61
  %v66 = vmax.f32 %v65, %v62
  %v67 = vsub.f32 %v58, %v66
  %v68 = vsub.f32 %v59, %v66
  %v69 = vsub.f32 %v60, %v66
  %v70 = vsub.f32 %v61, %v66
  %v71 = vsub.f32 %v62, %v66
  %v72 = vmul.f32 %v67, 1.442695
  %v73 = vpow.pop %v72
  %v74 = vmul.f32 %v68, 1.442695
  %v75 = vpow.pop %v74
  %v76 = vmul.f32 %v69, 1.442695
  %v77 = vpow.pop %v76
  %v78 = vmul.f32 %v70, 1.442695
  %v79 = vpow.pop %v78
  %v80 = vmul.f32 %v71, 1.442695
  %v81 = vpow.pop %v80
  %v82 = vadd.f32 %v73, %v75
  %v83 = vadd.f32 %v82, %v77
  %v84 = vadd.f32 %v83, %v79
  %v85 = vadd.f32 %v84, %v81
  %v86 = vrcp.pop %v85
  %v87 = vmul.f32 %v73, %v86
  %v88 = vmul.f32 %v75, %v86
  %v89 = vmul.f32 %v77, %v86
  %v90 = vmul.f32 %v79, %v86
  %v91 = vmul.f32 %v81, %v86
  %v92 = vmul.f32 %v11, 2.0
  %v93 = vmul.f32 %v92, -3.912023
  %v94 = vmul.f32 %v93, 1.442695
  %v95 = vpow.pop %v94
  %v96 = vsub.f32 1.0, %v95
  %v97 = vmul.f32 %v96, %v12
  %v98 = vmul.f32 %v96, %v13
  %v99 = vmul.f32 %v96, %v14
  %v100 = vsub.f32 1.0, %v96
  %v101 = vmul.f32 %v96, %v100
  %v102 = vrsqrt.pop %v101
  %v103 = vmul.f32 %v101, %v102
  %vm104 = vcmp.eq.f32.partialorder %v101, inf
  %v105 = vsel %vm104, %v101, %v103
  %vm106 = vcmp.eq.f32.partialorder %v101, 0.0
  %v107 = vand.u32 %v101, 2147483648
  %v108 = vsel %vm106, %v107, %v105
  %v109 = vmul.f32 %v25, %v108
  %v110 = vmul.f32 %v26, %v108
  %v111 = vmul.f32 %v27, %v108
  %v112 = vadd.f32 %v97, %v109
  %v113 = vadd.f32 %v98, %v110
  %v114 = vadd.f32 %v99, %v111
  %115 = vst [vmem:[%s2] sm:$0x1] %v87
  %116 = vst [vmem:[%s2 + $0x1] sm:$0x1] %v88
  %117 = vst [vmem:[%s2 + $0x2] sm:$0x1] %v89
  %118 = vst [vmem:[%s2 + $0x3] sm:$0x1] %v90
  %119 = vst [vmem:[%s2 + $0x4] sm:$0x1] %v91
  %s120 = scalar_lea.vmem %s2, 5
  %121 = vst [vmem:[%s120] sm:$0x1] %v112
  %122 = vst [vmem:[%s120 + $0x1] sm:$0x1] %v113
  %123 = vst [vmem:[%s120 + $0x2] sm:$0x1] %v114
  %s124 = scalar_lea.vmem %s2, 8
  %125 = vst [vmem:[%s124] sm:$0x1] %v96
  // Predicated region
  $region10: #{bayesian_flows.1} parent=0 // pred_check
    _
  $region11: #{bayesian_flows.1} parent=0 // pred_check_branch
    %127 = sbr.rel (0) target = $region13
  $region12: #{bayesian_flows.1} parent=0 // pred_region
    _
  $region13: #{bayesian_flows.1} parent=0 // pred_fallthru
    _
  // Predicated region
  $region14: #{bayesian_flows.1} parent=0 // pred_check
    _
  $region15: #{bayesian_flows.1} parent=0 // pred_check_branch
    %129 = sbr.rel (0) target = $region17
  $region16: #{bayesian_flows.1} parent=0 // pred_region
    _
  $region17: #{bayesian_flows.1} parent=0 // pred_fallthru
    _

</llo_original>
